<compile_context>
chip_gen: v5e
topology: v5e:2x2
jax: 0.10.0
libtpu: 0.0.40
codegen_flags: <defaults>
</compile_context>

<pallas_src>
import math
from typing import Any, NamedTuple, Optional

import jax
import jax.numpy as jnp
from jax.experimental import pallas as pl
from jax.experimental.pallas import tpu as pltpu


def _round_up(x, m):
    return ((x + m - 1) // m) * m


# --------------------------------------------------------------------------- #
# Kernels
# --------------------------------------------------------------------------- #
def _lora_linear_kernel(x_ref, wt_ref, xa_ref, bt_ref, o_ref, acc_ref):
    """One (i, j, k) grid step of  out = x @ Wt + xa @ Bt.

    Grid: (M_tiles, N_tiles, K_tiles), K innermost ("arbitrary" reduction).
      x_ref  : (tm, tk) compute dtype   activation tile
      wt_ref : (tk, tn) compute dtype   W.T tile
      xa_ref : (tm, r)  f32             precomputed bottleneck x @ (scaling*A).T
      bt_ref : (r, tn)  f32             B.T tile
      acc_ref: (tm, tn) f32 VMEM        base-projection accumulator
    """
    k = pl.program_id(2)

    base = jnp.dot(x_ref[...], wt_ref[...], preferred_element_type=jnp.float32)

    # v5e: write (not zero-then-add) on the first K step -> one fewer full-tile
    # store competing for the single vector-store slot.
    @pl.when(k == 0)
    def _first():
        acc_ref[...] = base

    @pl.when(k > 0)
    def _accum():
        acc_ref[...] += base

    @pl.when(k == pl.num_programs(2) - 1)
    def _finalize():
        # LoRA epilogue: tiny (tm, r) @ (r, tn) matmul, LHS kept in f32.
        lora = jnp.dot(xa_ref[...], bt_ref[...],
                       preferred_element_type=jnp.float32)
        o_ref[...] = (acc_ref[...] + lora).astype(o_ref.dtype)


def _gemm_kernel(x_ref, wt_ref, o_ref, acc_ref):
    """Plain tiled GEMM for the merged-weight fast path (W' = W + s*B@A)."""
    k = pl.program_id(2)
    base = jnp.dot(x_ref[...], wt_ref[...], preferred_element_type=jnp.float32)

    @pl.when(k == 0)
    def _first():
        acc_ref[...] = base

    @pl.when(k > 0)
    def _accum():
        acc_ref[...] += base

    @pl.when(k == pl.num_programs(2) - 1)
    def _finalize():
        o_ref[...] = acc_ref[...].astype(o_ref.dtype)


# --------------------------------------------------------------------------- #
# One-time weight preparation (hoisted out of the hot path)
# --------------------------------------------------------------------------- #
class LoRAParams(NamedTuple):
    wt: jax.Array              # (k_pad, n_pad) W.T (merged if merged), compute dt
    at: Optional[jax.Array]    # (in_f, r)  (scaling * A).T, compute dtype
    bt: Optional[jax.Array]    # (r, n_pad) B.T, float32
    in_features: int
    out_features: int
    r: int
    k_pad: int
    n_pad: int
    tn: int
    tk: int
    compute_dtype: Any
    merged: bool


def prepare_lora_params(weight, lora_A, lora_B, *, alpha=32,
                        compute_dtype=jnp.bfloat16,
                        tn=1024, tk=1024, merge_lora=False):
    """Pre-transpose / fold scaling / cast / zero-pad the frozen weights ONCE.

    weight: (out, in); lora_A: (r, in); lora_B: (out, r).
    Call once per set of weights and reuse the result across lora_linear calls
    so no per-call HBM passes over the weight remain.
    """
    out_f, in_f = weight.shape
    r = lora_A.shape[0]
    scaling = alpha / r
    cd = weight.dtype if compute_dtype is None else compute_dtype

    # Tile / padding choices for N and K (depend only on the weights).
    tn = min(tn, _round_up(out_f, 128))
    n_pad = _round_up(out_f, tn)
    if _round_up(in_f, 128) <= tk:
        tk = _round_up(in_f, 128)          # single K block
        k_pad = tk
    else:
        tk = _round_up(tk, 128)
        k_pad = _round_up(in_f, tk)

    if merge_lora:
        # Frozen-weight inference fast path: fold the LoRA delta into W.
        w_eff = (weight.astype(jnp.float32)
                 + scaling * (lora_B.astype(jnp.float32)
                              @ lora_A.astype(jnp.float32)))
        wt = w_eff.T.astype(cd)
        at = None
        bt = None
    else:
        wt = weight.T.astype(cd)                                   # (in_f, out_f)
        at = (scaling * lora_A.astype(jnp.float32)).T.astype(cd)   # (in_f, r)
        bt = lora_B.T.astype(jnp.float32)                          # (r, out_f)

    if k_pad != in_f:
        wt = jnp.pad(wt, ((0, k_pad - in_f), (0, 0)))
    if n_pad != out_f:
        wt = jnp.pad(wt, ((0, 0), (0, n_pad - out_f)))
        if bt is not None:
            bt = jnp.pad(bt, ((0, 0), (0, n_pad - out_f)))

    return LoRAParams(wt=wt, at=at, bt=bt, in_features=in_f, out_features=out_f,
                      r=r, k_pad=k_pad, n_pad=n_pad, tn=tn, tk=tk,
                      compute_dtype=cd, merged=merge_lora)


# --------------------------------------------------------------------------- #
# Forward pass
# --------------------------------------------------------------------------- #
def lora_linear(x, params: LoRAParams, *, tm=512,
                vmem_limit_bytes=48 * 1024 * 1024):
    """LoRALinear forward: x @ W.T + (alpha/r) * ((x @ A.T) @ B.T)."""
    in_f, out_f = params.in_features, params.out_features
    lead_shape = x.shape[:-1]
    out_dtype = x.dtype

    x2d = x.reshape(-1, in_f)
    M = x2d.shape[0]
    # TODO(synk): train-mode dropout on x2d would go here (eval = identity).
    xc = x2d.astype(params.compute_dtype)

    # M tiling is per-call; N/K tiling was fixed at prepare time.
    tm = min(tm, _round_up(M, 8))
    m_pad = _round_up(M, tm)
    tn, n_pad, tk, k_pad = params.tn, params.n_pad, params.tk, params.k_pad

    m_tiles, n_tiles, k_tiles = m_pad // tm, n_pad // tn, k_pad // tk
    # v7x megacore: guarantee >= 2 parallel tiles for decode-sized shapes.
    if m_tiles == 1 and n_tiles == 1 and n_pad % 256 == 0:
        tn = n_pad // 2
        n_tiles = 2

    xa = None
    if not params.merged:
        # LoRA bottleneck once per call (tiny M*K*r GEMM), f32 result.
        xa = jnp.dot(xc, params.at, preferred_element_type=jnp.float32)  # (M, r)

    if k_pad != in_f:
        xc = jnp.pad(xc, ((0, 0), (0, k_pad - in_f)))
    if m_pad != M:
        xc = jnp.pad(xc, ((0, m_pad - M), (0, 0)))
        if xa is not None:
            xa = jnp.pad(xa, ((0, m_pad - M), (0, 0)))

    grid = (m_tiles, n_tiles, k_tiles)
    cparams = pltpu.CompilerParams(
        dimension_semantics=("parallel", "parallel", "arbitrary"),
        vmem_limit_bytes=vmem_limit_bytes)

    flops = 2 * m_pad * k_pad * n_pad
    bytes_accessed = (xc.size * xc.dtype.itemsize
                      + params.wt.size * params.wt.dtype.itemsize
                      + m_pad * n_pad * out_dtype.itemsize)
    if not params.merged:
        flops += 2 * m_pad * params.r * n_pad
        bytes_accessed += (xa.size * xa.dtype.itemsize
                           + params.bt.size * params.bt.dtype.itemsize)
    cost = pl.CostEstimate(flops=flops, transcendentals=0,
                           bytes_accessed=bytes_accessed)

    if params.merged:
        out2d = pl.pallas_call(
            _gemm_kernel,
            out_shape=jax.ShapeDtypeStruct((m_pad, n_pad), out_dtype),
            grid_spec=pltpu.PrefetchScalarGridSpec(
                num_scalar_prefetch=0,
                grid=grid,
                in_specs=[
                    pl.BlockSpec((tm, tk), lambda i, j, k: (i, k)),   # x tile
                    pl.BlockSpec((tk, tn), lambda i, j, k: (k, j)),   # W'.T tile
                ],
                out_specs=pl.BlockSpec((tm, tn), lambda i, j, k: (i, j)),
                scratch_shapes=[pltpu.VMEM((tm, tn), jnp.float32)],
            ),
            compiler_params=cparams,
            cost_estimate=cost,
        )(xc, params.wt)
    else:
        r = params.r
        out2d = pl.pallas_call(
            _lora_linear_kernel,
            out_shape=jax.ShapeDtypeStruct((m_pad, n_pad), out_dtype),
            grid_spec=pltpu.PrefetchScalarGridSpec(
                num_scalar_prefetch=0,
                grid=grid,
                in_specs=[
                    pl.BlockSpec((tm, tk), lambda i, j, k: (i, k)),   # x tile
                    pl.BlockSpec((tk, tn), lambda i, j, k: (k, j)),   # W.T tile
                    pl.BlockSpec((tm, r), lambda i, j, k: (i, 0)),    # x@(s*A).T
                    pl.BlockSpec((r, tn), lambda i, j, k: (0, j)),    # B.T tile
                ],
                out_specs=pl.BlockSpec((tm, tn), lambda i, j, k: (i, j)),
                scratch_shapes=[pltpu.VMEM((tm, tn), jnp.float32)],
            ),
            compiler_params=cparams,
            cost_estimate=cost,
        )(xc, params.wt, xa, params.bt)

    return out2d[:M, :out_f].reshape(*lead_shape, out_f)


def lora_linear_from_raw(x, weight, lora_A, lora_B, *, alpha=32,
                         compute_dtype=jnp.bfloat16, tm=512, tn=1024, tk=1024,
                         merge_lora=False):
    """Convenience one-shot wrapper (re-runs the weight prep every call).

    Production/frozen-weight use should call prepare_lora_params() once and
    reuse the result with lora_linear().
    """
    params = prepare_lora_params(weight, lora_A, lora_B, alpha=alpha,
                                 compute_dtype=compute_dtype, tn=tn, tk=tk,
                                 merge_lora=merge_lora)
    return lora_linear(x, params, tm=tm)


# --------------------------------------------------------------------------- #
# Init mirroring the PyTorch module, pure-JAX reference, self-test
# --------------------------------------------------------------------------- #
def init_params(key, in_features, out_features, r=16):
    """Deterministic parameter init mirroring the PyTorch module's __init__."""
    k_w, k_a = jax.random.split(key)
    # kaiming_uniform_(a=sqrt(5)) -> U(-bound, bound), bound = sqrt(1 / fan_in)
    bound = math.sqrt(1.0 / in_features)
    weight = jax.random.uniform(k_w, (out_features, in_features),
                                jnp.float32, minval=-bound, maxval=bound)
    lora_A = jax.random.normal(k_a, (r, in_features), jnp.float32) * 0.01
    lora_B = jnp.zeros((out_features, r), jnp.float32)
    return weight, lora_A, lora_B


def _reference(x, weight, lora_A, lora_B, alpha, r):
    scaling = alpha / r
    return x @ weight.T + scaling * ((x @ lora_A.T) @ lora_B.T)


if __name__ == "__main__":
    # ---- check 1: small aligned shapes, strict f32 compute path. ----
    batch, seq, in_features, out_features, r, alpha = 2, 8, 32, 32, 16, 32

    key = jax.random.PRNGKey(0)
    k_x, k_p = jax.random.split(key)
    x = jax.random.normal(k_x, (batch, seq, in_features), jnp.float32)
    weight, lora_A, lora_B = init_params(k_p, in_features, out_features, r=r)
    # Make the LoRA path numerically non-trivial (B is zeros at init).
    lora_B = jax.random.normal(jax.random.PRNGKey(1),
                               (out_features, r), jnp.float32) * 0.01
    ref = _reference(x, weight, lora_A, lora_B, alpha, r)

    params_f32 = prepare_lora_params(weight, lora_A, lora_B, alpha=alpha,
                                     compute_dtype=jnp.float32)
    out = jax.block_until_ready(lora_linear(x, params_f32))
    assert out.shape == (batch, seq, out_features)
    assert jnp.allclose(out, ref, atol=1e-5, rtol=1e-5)

    # ---- check 2: ragged M, unaligned out_f, K-tiled reduction; also hits the
    # v7x >=2-parallel-tiles N-split (j>0 reuses the same xa/acc pattern). ----
    b2, s2, in2, o2, r2, a2 = 3, 5, 256, 160, 8, 16
    kx2, kp2 = jax.random.split(jax.random.PRNGKey(2))
    x2 = jax.random.normal(kx2, (b2, s2, in2), jnp.float32)
    w2, A2, B2 = init_params(kp2, in2, o2, r=r2)
    B2 = jax.random.normal(jax.random.PRNGKey(3), (o2, r2), jnp.float32) * 0.01
    ref2 = _reference(x2, w2, A2, B2, a2, r2)

    params2 = prepare_lora_params(w2, A2, B2, alpha=a2,
                                  compute_dtype=jnp.float32, tk=128)
    y2 = jax.block_until_ready(lora_linear(x2, params2))
    assert y2.shape == (b2, s2, o2)
    assert jnp.allclose(y2, ref2, atol=1e-4, rtol=1e-4)

    # ---- check 3: default bf16 compute path (MXU peak), f32 accumulation. ----
    params_bf16 = prepare_lora_params(weight, lora_A, lora_B, alpha=alpha)
    out_bf16 = jax.block_until_ready(lora_linear(x, params_bf16))
    assert jnp.allclose(out_bf16, ref, atol=5e-2, rtol=5e-2)

    # ---- check 4: merged-weight fast path (W' = W + scaling*B@A). ----
    params_merged = prepare_lora_params(weight, lora_A, lora_B, alpha=alpha,
                                        compute_dtype=jnp.float32,
                                        merge_lora=True)
    out_merged = jax.block_until_ready(lora_linear(x, params_merged))
    assert jnp.allclose(out_merged, ref, atol=1e-5, rtol=1e-5)

    print("KERNEL_OK")
</pallas_src>

<mosaic_0001>
module attributes {stable_mosaic.version = 11 : i64} {
  func.func @_lora_linear_kernel(%arg0: i32, %arg1: i32, %arg2: i32, %arg3: memref<16x128xf32, #tpu.memory_space<vmem>>, %arg4: memref<128x128xf32, #tpu.memory_space<vmem>>, %arg5: memref<16x16xf32, #tpu.memory_space<vmem>>, %arg6: memref<16x128xf32, #tpu.memory_space<vmem>>, %arg7: memref<16x128xf32, #tpu.memory_space<vmem>>, %arg8: memref<16x128xf32, #tpu.memory_space<vmem>>) attributes {dimension_semantics = [#tpu.dimension_semantics<parallel>, #tpu.dimension_semantics<parallel>, #tpu.dimension_semantics<arbitrary>], iteration_bounds = array<i64: 1, 1, 1>, scalar_prefetch = 0 : i64, scratch_operands = 1 : i64, tpu.core_type = #tpu.core_type<tc>, window_params = [{transform_indices = @transform_0, window_bounds = array<i64: 16, 128>}, {transform_indices = @transform_1, window_bounds = array<i64: 128, 128>}, {transform_indices = @transform_2, window_bounds = array<i64: 16, 16>}, {transform_indices = @transform_3, window_bounds = array<i64: 16, 128>}, {transform_indices = @transform_4, window_bounds = array<i64: 16, 128>}]} {
    %c0 = arith.constant 0 : index
    %c0_0 = arith.constant 0 : index
    %0 = vector.load %arg3[%c0, %c0_0] : memref<16x128xf32, #tpu.memory_space<vmem>>, vector<16x128xf32>
    %c0_1 = arith.constant 0 : index
    %c0_2 = arith.constant 0 : index
    %1 = vector.load %arg4[%c0_1, %c0_2] : memref<128x128xf32, #tpu.memory_space<vmem>>, vector<128x128xf32>
    %cst = arith.constant dense<0.000000e+00> : vector<16x128xf32>
    %2 = tpu.matmul %0, %1, %cst {dimension_numbers = #tpu.dot_dimension_numbers<[1], [0], [0], [1], [0, 0, 1, 1], [], []>} : vector<16x128xf32>, vector<128x128xf32>, vector<16x128xf32> -> vector<16x128xf32>
    %c0_i32 = arith.constant 0 : i32
    %3 = arith.cmpi eq, %arg2, %c0_i32 : i32
    %4 = arith.extui %3 : i1 to i32
    %c0_i32_3 = arith.constant 0 : i32
    %5 = arith.cmpi ne, %4, %c0_i32_3 : i32
    scf.if %5 {
      %c0_8 = arith.constant 0 : index
      %c0_9 = arith.constant 0 : index
      %12 = vector.load %arg8[%c0_8, %c0_9] : memref<16x128xf32, #tpu.memory_space<vmem>>, vector<16x128xf32>
      tpu.vector_store %arg8[%c0_8, %c0_9], %2 {strides = array<i32>} : memref<16x128xf32, #tpu.memory_space<vmem>>, vector<16x128xf32>,
    } else {
    }
    %c0_i32_4 = arith.constant 0 : i32
    %6 = arith.cmpi sgt, %arg2, %c0_i32_4 : i32
    %7 = arith.extui %6 : i1 to i32
    %c0_i32_5 = arith.constant 0 : i32
    %8 = arith.cmpi ne, %7, %c0_i32_5 : i32
    scf.if %8 {
      %c0_8 = arith.constant 0 : index
      %c0_9 = arith.constant 0 : index
      %12 = vector.load %arg8[%c0_8, %c0_9] : memref<16x128xf32, #tpu.memory_space<vmem>>, vector<16x128xf32>
      %13 = arith.addf %12, %2 : vector<16x128xf32>
      %c0_10 = arith.constant 0 : index
      %c0_11 = arith.constant 0 : index
      %14 = vector.load %arg8[%c0_10, %c0_11] : memref<16x128xf32, #tpu.memory_space<vmem>>, vector<16x128xf32>
      tpu.vector_store %arg8[%c0_10, %c0_11], %13 {strides = array<i32>} : memref<16x128xf32, #tpu.memory_space<vmem>>, vector<16x128xf32>,
    } else {
    }
    %c0_i32_6 = arith.constant 0 : i32
    %9 = arith.cmpi eq, %arg2, %c0_i32_6 : i32
    %10 = arith.extui %9 : i1 to i32
    %c0_i32_7 = arith.constant 0 : i32
    %11 = arith.cmpi ne, %10, %c0_i32_7 : i32
    scf.if %11 {
      %c0_8 = arith.constant 0 : index
      %c0_9 = arith.constant 0 : index
      %12 = vector.load %arg5[%c0_8, %c0_9] : memref<16x16xf32, #tpu.memory_space<vmem>>, vector<16x16xf32>
      %c0_10 = arith.constant 0 : index
      %c0_11 = arith.constant 0 : index
      %13 = vector.load %arg6[%c0_10, %c0_11] : memref<16x128xf32, #tpu.memory_space<vmem>>, vector<16x128xf32>
      %cst_12 = arith.constant dense<0.000000e+00> : vector<16x128xf32>
      %14 = tpu.matmul %12, %13, %cst_12 {dimension_numbers = #tpu.dot_dimension_numbers<[1], [0], [0], [1], [0, 0, 1, 1], [], []>} : vector<16x16xf32>, vector<16x128xf32>, vector<16x128xf32> -> vector<16x128xf32>
      %c0_13 = arith.constant 0 : index
      %c0_14 = arith.constant 0 : index
      %15 = vector.load %arg8[%c0_13, %c0_14] : memref<16x128xf32, #tpu.memory_space<vmem>>, vector<16x128xf32>
      %16 = arith.addf %15, %14 : vector<16x128xf32>
      %c0_15 = arith.constant 0 : index
      %c0_16 = arith.constant 0 : index
      %17 = vector.load %arg7[%c0_15, %c0_16] : memref<16x128xf32, #tpu.memory_space<vmem>>, vector<16x128xf32>
      tpu.vector_store %arg7[%c0_15, %c0_16], %16 {strides = array<i32>} : memref<16x128xf32, #tpu.memory_space<vmem>>, vector<16x128xf32>,
    } else {
    }
    return
  }
  func.func @transform_0(%arg0: i32, %arg1: i32, %arg2: i32) -> (i32, i32) {
    %c0_i32 = arith.constant 0 : i32
    return %arg0, %arg2 : i32, i32
  }
  func.func @transform_1(%arg0: i32, %arg1: i32, %arg2: i32) -> (i32, i32) {
    %c0_i32 = arith.constant 0 : i32
    return %arg2, %arg1 : i32, i32
  }
  func.func @transform_2(%arg0: i32, %arg1: i32, %arg2: i32) -> (i32, i32) {
    %c0_i32 = arith.constant 0 : i32
    %c0_i32_0 = arith.constant 0 : i32
    return %arg0, %c0_i32 : i32, i32
  }
  func.func @transform_3(%arg0: i32, %arg1: i32, %arg2: i32) -> (i32, i32) {
    %c0_i32 = arith.constant 0 : i32
    %c0_i32_0 = arith.constant 0 : i32
    return %c0_i32, %arg1 : i32, i32
  }
  func.func @transform_4(%arg0: i32, %arg1: i32, %arg2: i32) -> (i32, i32) {
    %c0_i32 = arith.constant 0 : i32
    return %arg0, %arg1 : i32, i32
  }
}

</mosaic_0001>

<llo_original>
// kernel: tpu_custom_call.1
$region0: #{tpu_custom_call.1}
  #allocation0 [shape = 'u32[]', space=smem, size = 0x4, offset = 0x4, fixed_abs, tag = 'smem constant byte address 0x4 - core index']
  #allocation1 [shape = 'u32[72,128]{1,0:T(1,128)}', space=vmem, size = 0x9000, scoped, tag = 'internal scratch']
  #allocation2 [shape = 'f32[16,128]{1,0:T(8,128)}', space=vmem, size = 0x2000, scoped, tag = 'scratch operand']
  %s0 = inlined_call_operand.hbm [shape: f32[16,128], index: 0, kind: input, shape index: {}]
  %s1 = inlined_call_operand.hbm [shape: f32[128,128], index: 1, kind: input, shape index: {}]
  %s2 = inlined_call_operand.hbm [shape: f32[16,16], index: 2, kind: input, shape index: {}]
  %s3 = inlined_call_operand.hbm [shape: f32[16,128], index: 3, kind: input, shape index: {}]
  %s4 = inlined_call_operand.hbm [shape: f32[16,128], index: 4, kind: output, shape index: {}]
  %s5 = sld [smem:[#allocation0]]
  $region54: #{tpu_custom_call.1} parent=0
    _
  %s7 = ssub.s32 1, %s5
  %s8 = scalar_select 0, %s7, %s5
  $region1: #{tpu_custom_call.1} parent=0
    #allocation3 [shape = 'u8[8192]{0}', space=vmem, size = 0x2000, scoped, tag = 'input window, operand 0, single buffered']
    #allocation4 [shape = 's32[1]{0}', space=sflag, size = 0x4, scoped, tag = 'scoped memory for tpu_custom_call.1']
    #allocation5 [shape = 's32[1]{0}', space=sflag, size = 0x4, scoped, tag = 'scoped memory for tpu_custom_call.1']
    #allocation6 [shape = 'u8[65536]{0}', space=vmem, size = 0x10000, scoped, tag = 'input window, operand 1, single buffered']
    #allocation7 [shape = 's32[1]{0}', space=sflag, size = 0x4, scoped, tag = 'scoped memory for tpu_custom_call.1']
    #allocation8 [shape = 'u8[8192]{0}', space=vmem, size = 0x2000, scoped, tag = 'input window, operand 2, single buffered']
    #allocation9 [shape = 'u8[8192]{0}', space=vmem, size = 0x2000, scoped, tag = 'input window, operand 3, single buffered']
    #allocation10 [shape = 's32[1]{0}', space=sflag, size = 0x4, scoped, tag = 'scoped memory for tpu_custom_call.1']
    #allocation11 [shape = 'u8[8192]{0}', space=vmem, size = 0x2000, scoped, tag = 'output window, operand 0, single buffered']
    %9 = vsyncpa [#allocation4], 0
    %10 = vsyncpa [#allocation7], 0
    %11 = vsyncpa [#allocation10], 0
    %12 = vsyncpa [#allocation5], 0
    // Predicated region
    $region2: #{tpu_custom_call.1} parent=1 // pred_check
      _
    $region3: #{tpu_custom_call.1} parent=1 // pred_check_branch
      %14 = sbr.rel (0) target = $region5
    $region4: #{tpu_custom_call.1} parent=1 // pred_region
      %16 = vsyncadd [#allocation4], 0
      %s17 = sshll.u32 %s0, 4
      %s18 = int_to_ptr.hbm [resolvable:$true] %s17
      %s19 = sshll.u32 [#allocation3], 4
      %s20 = int_to_ptr.vmem [resolvable:$true] %s19
      %25 = dma.hbm_to_vmem [thread:$0]  %s18, 256, %s20, [#allocation4], 128, 128, 8
    $region5: #{tpu_custom_call.1} parent=1 // pred_fallthru
      _
    // Predicated region
    $region6: #{tpu_custom_call.1} parent=1 // pred_check
      _
    $region7: #{tpu_custom_call.1} parent=1 // pred_check_branch
      %27 = sbr.rel (0) target = $region9
    $region8: #{tpu_custom_call.1} parent=1 // pred_region
      %29 = vsyncadd [#allocation7], 0
      %s30 = sshll.u32 %s1, 4
      %s31 = int_to_ptr.hbm [resolvable:$true] %s30
      %s32 = sshll.u32 [#allocation6], 4
      %s33 = int_to_ptr.vmem [resolvable:$true] %s32
      %38 = dma.hbm_to_vmem [thread:$0]  %s31, 2048, %s33, [#allocation7], 128, 128, 8
    $region9: #{tpu_custom_call.1} parent=1 // pred_fallthru
      _
    // Predicated region
    $region10: #{tpu_custom_call.1} parent=1 // pred_check
      _
    $region11: #{tpu_custom_call.1} parent=1 // pred_check_branch
      %40 = sbr.rel (0) target = $region13
    $region12: #{tpu_custom_call.1} parent=1 // pred_region
      %42 = vsyncadd [#allocation7], 0
      %s43 = sshll.u32 %s2, 4
      %s44 = int_to_ptr.hbm [resolvable:$true] %s43
      %s45 = sshll.u32 [#allocation8], 4
      %s46 = int_to_ptr.vmem [resolvable:$true] %s45
      %51 = dma.hbm_to_vmem [thread:$0]  %s44, 256, %s46, [#allocation7], 128, 128, 8
    $region13: #{tpu_custom_call.1} parent=1 // pred_fallthru
      _
    // Predicated region
    $region14: #{tpu_custom_call.1} parent=1 // pred_check
      _
    $region15: #{tpu_custom_call.1} parent=1 // pred_check_branch
      %53 = sbr.rel (0) target = $region17
    $region16: #{tpu_custom_call.1} parent=1 // pred_region
      %55 = vsyncadd [#allocation10], 0
      %s56 = sshll.u32 %s3, 4
      %s57 = int_to_ptr.hbm [resolvable:$true] %s56
      %s58 = sshll.u32 [#allocation9], 4
      %s59 = int_to_ptr.vmem [resolvable:$true] %s58
      %64 = dma.hbm_to_vmem [thread:$0]  %s57, 256, %s59, [#allocation10], 128, 128, 8
    $region17: #{tpu_custom_call.1} parent=1 // pred_fallthru
      _
    // Predicated region
    $region18: #{tpu_custom_call.1} parent=1 // pred_check
      _
    $region19: #{tpu_custom_call.1} parent=1 // pred_check_branch
      %66 = sbr.rel (0) target = $region21
    $region20: #{tpu_custom_call.1} parent=1 // pred_region
      %68 = dma.done [#allocation4], 256
    $region21: #{tpu_custom_call.1} parent=1 // pred_fallthru
      _
    // Predicated region
    $region22: #{tpu_custom_call.1} parent=1 // pred_check
      _
    $region23: #{tpu_custom_call.1} parent=1 // pred_check_branch
      %70 = sbr.rel (0) target = $region25
    $region24: #{tpu_custom_call.1} parent=1 // pred_region
      %72 = dma.done [#allocation7], 2048
    $region25: #{tpu_custom_call.1} parent=1 // pred_fallthru
      _
    // Predicated region
    $region26: #{tpu_custom_call.1} parent=1 // pred_check
      _
    $region27: #{tpu_custom_call.1} parent=1 // pred_check_branch
      %74 = sbr.rel (0) target = $region29
    $region28: #{tpu_custom_call.1} parent=1 // pred_region
      %76 = dma.done [#allocation7], 256
    $region29: #{tpu_custom_call.1} parent=1 // pred_fallthru
      _
    // Predicated region
    $region30: #{tpu_custom_call.1} parent=1 // pred_check
      _
    $region31: #{tpu_custom_call.1} parent=1 // pred_check_branch
      %78 = sbr.rel (0) target = $region33
    $region32: #{tpu_custom_call.1} parent=1 // pred_region
      %80 = dma.done [#allocation10], 256
    $region33: #{tpu_custom_call.1} parent=1 // pred_fallthru
      _
    %v81 = vld [vmem:[#allocation3] sm:$0xff]
    %v82 = vld [vmem:[#allocation3 + $0x8] sm:$0xff]
    %v83 = vld [vmem:[#allocation6] sm:$0xff]
    %v84 = vld [vmem:[#allocation6 + $0x8] sm:$0xff]
    %v85 = vld [vmem:[#allocation6 + $0x10] sm:$0xff]
    %v86 = vld [vmem:[#allocation6 + $0x18] sm:$0xff]
    %v87 = vld [vmem:[#allocation6 + $0x20] sm:$0xff]
    %v88 = vld [vmem:[#allocation6 + $0x28] sm:$0xff]
    %v89 = vld [vmem:[#allocation6 + $0x30] sm:$0xff]
    %v90 = vld [vmem:[#allocation6 + $0x38] sm:$0xff]
    %v91 = vld [vmem:[#allocation6 + $0x40] sm:$0xff]
    %v92 = vld [vmem:[#allocation6 + $0x48] sm:$0xff]
    %v93 = vld [vmem:[#allocation6 + $0x50] sm:$0xff]
    %v94 = vld [vmem:[#allocation6 + $0x58] sm:$0xff]
    %v95 = vld [vmem:[#allocation6 + $0x60] sm:$0xff]
    %v96 = vld [vmem:[#allocation6 + $0x68] sm:$0xff]
    %v97 = vld [vmem:[#allocation6 + $0x70] sm:$0xff]
    %v98 = vld [vmem:[#allocation6 + $0x78] sm:$0xff]
    %99 = vmatpush.msra.mxu0 %v98
    %100 = vmatpush.msra.mxu0 %v97
    %101 = vmatpush.msra.mxu0 %v96
    %102 = vmatpush.msra.mxu0 %v95
    %103 = vmatpush.msra.mxu0 %v94
    %104 = vmatpush.msra.mxu0 %v93
    %105 = vmatpush.msra.mxu0 %v92
    %106 = vmatpush.msra.mxu0 %v91
    %107 = vmatpush.msra.mxu0 %v90
    %108 = vmatpush.msra.mxu0 %v89
    %109 = vmatpush.msra.mxu0 %v88
    %110 = vmatpush.msra.mxu0 %v87
    %111 = vmatpush.msra.mxu0 %v86
    %112 = vmatpush.msra.mxu0 %v85
    %113 = vmatpush.msra.mxu0 %v84
    %114 = vmatpush.msra.mxu0 %v83
    %115 = vmatmul.f32.gmra.mxu0 %v81
    %v116 = vpop.f32.mrf.mxu0
    %v117 = vadd.f32 0.0, %v116
    %118 = vmatmul.f32.gmra.mxu0 %v82
    %v119 = vpop.f32.mrf.mxu0
    %v120 = vadd.f32 0.0, %v119
    %121 = vdwg.mxu0
    %p122 = scmp.eq.s32.totalorder 0, 0
    // Predicated region
    $region34: #{tpu_custom_call.1} parent=1 // pred_check
      %p123 = pneg %p122
    $region35: #{tpu_custom_call.1} parent=1 // pred_check_branch
      %125 = sbr.rel (%p123) target = $region37
    $region36: #{tpu_custom_call.1} parent=1 // pred_region
      %126 = vst [vmem:[#allocation2] sm:$0xff] %v117
      %127 = vst [vmem:[#allocation2 + $0x8] sm:$0xff] %v120
    $region37: #{tpu_custom_call.1} parent=1 // pred_fallthru
      _
    %p128 = scmp.gt.s32.totalorder 0, 0
    // Predicated region
    $region38: #{tpu_custom_call.1} parent=1 // pred_check
      %p129 = pneg %p128
    $region39: #{tpu_custom_call.1} parent=1 // pred_check_branch
      %131 = sbr.rel (%p129) target = $region41
    $region40: #{tpu_custom_call.1} parent=1 // pred_region
      %v132 = vld [vmem:[#allocation2] sm:$0xff]
      %v133 = vld [vmem:[#allocation2 + $0x8] sm:$0xff]
      %v134 = vadd.f32 %v132, %v117
      %v135 = vadd.f32 %v133, %v120
      %136 = vst [vmem:[#allocation2] sm:$0xff] %v134
      %137 = vst [vmem:[#allocation2 + $0x8] sm:$0xff] %v135
    $region41: #{tpu_custom_call.1} parent=1 // pred_fallthru
      _
    // Predicated region
    $region42: #{tpu_custom_call.1} parent=1 // pred_check
      %p138 = pneg %p122
    $region43: #{tpu_custom_call.1} parent=1 // pred_check_branch
      %140 = sbr.rel (%p138) target = $region45
    $region44: #{tpu_custom_call.1} parent=1 // pred_region
      %v141 = vld [vmem:[#allocation8] sm:$0xff]
      %v142 = vld [vmem:[#allocation8 + $0x8] sm:$0xff]
      %v143 = vld [vmem:[#allocation9] sm:$0xff]
      %v144 = vld [vmem:[#allocation9 + $0x8] sm:$0xff]
      %vm145 = vcmask 130048
      %v147 = vsel %vm145, %v141, 0
      %v150 = vsel %vm145, %v142, 0
      %152 = vmatpush.msra.mxu0 0.0
      %153 = vmatpush.msra.mxu0 0.0
      %154 = vmatpush.msra.mxu0 0.0
      %155 = vmatpush.msra.mxu0 0.0
      %156 = vmatpush.msra.mxu0 0.0
      %157 = vmatpush.msra.mxu0 0.0
      %158 = vmatpush.msra.mxu0 0.0
      %159 = vmatpush.msra.mxu0 0.0
      %160 = vmatpush.msra.mxu0 0.0
      %161 = vmatpush.msra.mxu0 0.0
      %162 = vmatpush.msra.mxu0 0.0
      %163 = vmatpush.msra.mxu0 0.0
      %164 = vmatpush.msra.mxu0 0.0
      %165 = vmatpush.msra.mxu0 0.0
      %166 = vmatpush.msra.mxu0 %v144
      %167 = vmatpush.msra.mxu0 %v143
      %168 = vmatmul.f32.gmra.mxu0 %v147
      %v169 = vpop.f32.mrf.mxu0
      %v170 = vadd.f32 0.0, %v169
      %171 = vmatmul.f32.gmra.mxu0 %v150
      %v172 = vpop.f32.mrf.mxu0
      %v173 = vadd.f32 0.0, %v172
      %174 = vdwg.mxu0
      %v175 = vld [vmem:[#allocation2] sm:$0xff]
      %v176 = vld [vmem:[#allocation2 + $0x8] sm:$0xff]
      %v177 = vadd.f32 %v175, %v170
      %v178 = vadd.f32 %v176, %v173
      %179 = vst [vmem:[#allocation11] sm:$0xff] %v177
      %180 = vst [vmem:[#allocation11 + $0x8] sm:$0xff] %v178
    $region45: #{tpu_custom_call.1} parent=1 // pred_fallthru
      _
    // Predicated region
    $region46: #{tpu_custom_call.1} parent=1 // pred_check
      _
    $region47: #{tpu_custom_call.1} parent=1 // pred_check_branch
      %182 = sbr.rel (0) target = $region49
    $region48: #{tpu_custom_call.1} parent=1 // pred_region
      %184 = vsyncadd [#allocation5], 0
      %s185 = sshll.u32 [#allocation11], 4
      %s186 = int_to_ptr.vmem [resolvable:$true] %s185
      %s187 = sshll.u32 %s4, 4
      %s188 = int_to_ptr.hbm [resolvable:$true] %s187
      %193 = dma.vmem_to_hbm [thread:$0]  %s186, 256, %s188, [#allocation5], 128, 128, 8
    $region49: #{tpu_custom_call.1} parent=1 // pred_fallthru
      _
    // Predicated region
    $region50: #{tpu_custom_call.1} parent=1 // pred_check
      _
    $region51: #{tpu_custom_call.1} parent=1 // pred_check_branch
      %195 = sbr.rel (0) target = $region53
    $region52: #{tpu_custom_call.1} parent=1 // pred_region
      %197 = dma.done [#allocation5], 256
    $region53: #{tpu_custom_call.1} parent=1 // pred_fallthru
      _
    %198 = vsyncpa [#allocation4], 1
    %199 = vsyncpa [#allocation7], 1
    %200 = vsyncpa [#allocation10], 1
    %201 = vsyncpa [#allocation5], 1

</llo_original>
